<compile_context>
chip_gen: v5e
topology: v5e:2x2
jax: 0.10.0
libtpu: 0.0.40
codegen_flags: <defaults>
</compile_context>

<pallas_src>
import functools

import jax
import jax.numpy as jnp
from jax.experimental import pallas as pl
from jax.experimental.pallas import tpu as pltpu


def _round_up(a, b):
    return -(-a // b) * b


def _dropblock1d_kernel(seed_ref, x_ref, o_ref, *, threshold, pad, true_feat,
                        tile_rows):
    rows, feat_p = x_ref.shape

    # ---- Bernoulli(gamma) seed mask via a counter-based hash (VPU only) ------
    # Hash input = global element index (tiling-invariant) mixed with the seed.
    row = jax.lax.broadcasted_iota(jnp.int32, (rows, feat_p), 0)
    col = jax.lax.broadcasted_iota(jnp.int32, (rows, feat_p), 1)
    grow = row + pl.program_id(0) * tile_rows            # global row index
    z = grow * jnp.int32(feat_p) + col                   # global element index
    z = z + seed_ref[0] * jnp.int32(-1640531527)         # + seed * 0x9E3779B9 (wraps)
    # lowbias32 finalizer.  For int32, (z >> k) & ((1<<(32-k))-1) == logical shift.
    z = z ^ ((z >> 16) & jnp.int32(0xFFFF))
    z = z * jnp.int32(0x7FEB352D)
    z = z ^ ((z >> 15) & jnp.int32(0x1FFFF))
    z = z * jnp.int32(-2073254261)                        # 0x846CA68B
    z = z ^ ((z >> 16) & jnp.int32(0xFFFF))
    u = z & jnp.int32(0x7FFFFFFF)                         # 31 uniform bits
    hit = jnp.where(u < jnp.int32(threshold), jnp.int32(1), jnp.int32(0))

    # Seeds may only fire inside the true feature range: the lane-padding region
    # must stay zero so it cannot dilate into real lanes.
    if true_feat != feat_p:
        hit = jnp.where(col < jnp.int32(true_feat), hit, jnp.int32(0))

    # ---- max_pool1d(k, stride=1, pad=k//2) over {0,1} == OR-dilation ---------
    # Zero-fill shifts (slice + concat) reproduce the zero-padded pool boundary
    # exactly, so no per-tap wraparound/validity masking is needed.
    drop = hit
    # TODO(synk): switch to log-time (prefix-doubling) dilation for block_size >= ~7.
    for d in range(1, pad + 1):
        z0 = jnp.zeros((rows, d), jnp.int32)
        drop = drop | jnp.concatenate([hit[:, d:], z0], axis=-1)              # i+d
        drop = drop | jnp.concatenate([z0, hit[:, : feat_p - d]], axis=-1)    # i-d

    x = x_ref[...]
    o_ref[...] = jnp.where(drop > 0, jnp.zeros_like(x), x)


def dropblock1d(x, seed, *, block_size=3, drop_prob=0.1, training=True):
    """Pallas implementation of DropBlock1D.forward (feature axis = last dim)."""
    if (not training) or drop_prob == 0:
        return x                                          # identity fast path

    if block_size % 2 != 1:
        # The PyTorch reference yields F+1 pooled outputs for even k and fails
        # to broadcast; only odd block sizes are well-defined.
        raise ValueError("DropBlock1D requires an odd block_size.")
    feat = x.shape[-1]
    if feat < block_size:
        raise ValueError("feature dim must be >= block_size")

    orig_shape = x.shape
    x2 = x.reshape(-1, feat)                              # (batch, features)
    batch = x2.shape[0]
    itemsize = x2.dtype.itemsize

    # Bernoulli threshold in 31-bit fixed point: P(drop seed) = gamma.
    gamma = drop_prob / block_size * (feat / (feat - block_size + 1))
    threshold = int(round(min(max(gamma, 0.0), 1.0) * float(1 << 31)))
    threshold = min(threshold, (1 << 31) - 1)

    # Lane-dense output: pad the feature axis to a multiple of 128 (sliced back
    # afterwards).  gamma / guard masking keep the true F.
    feat_p = _round_up(feat, 128)
    if feat_p != feat:
        x2 = jnp.pad(x2, ((0, 0), (0, feat_p - feat)))

    # ---- generation-aware batch tiling (full feature row stays in each tile) ----
    try:
        kind = jax.devices()[0].device_kind.lower()
    except Exception:
        kind = ""
    is_v7 = "v7" in kind
    # HBM-bound elementwise kernel: big-ish tiles, but leave VMEM room for the
    # int32 intermediates (hash / masks) on v7x's 64 MiB per-TC VMEM.
    target_tile_bytes = (2 if is_v7 else 4) * 1024 * 1024

    sub = max(8, 32 // itemsize)        # sublane packing: f32->8, bf16->16, int8->32
    bytes_per_row = feat_p * itemsize
    if batch <= sub:
        tb = batch
    else:
        tb = min(batch, max(1, target_tile_bytes // bytes_per_row))
        # At least two tiles so both v7x TensorCores get work ("parallel" axis).
        tb = min(tb, _round_up(pl.cdiv(batch, 2), sub))
        tb = max(sub, (tb // sub) * sub)
    grid = (pl.cdiv(batch, tb),)
    # TODO(synk): add feature-axis tiling (with a block_size//2 halo) for very wide F
    # where even an 8-row tile would strain VMEM.

    tile_bytes = tb * bytes_per_row
    try:
        vmem_cap = int(getattr(pltpu.get_tpu_info(), "vmem_capacity_bytes",
                               64 * 1024 * 1024))
    except Exception:
        vmem_cap = 64 * 1024 * 1024                       # assume worst case (v7x per-TC)
    vmem_limit = int(min(int(0.75 * vmem_cap),
                         max(32 * 1024 * 1024, 12 * tile_bytes)))

    kernel = functools.partial(
        _dropblock1d_kernel,
        threshold=threshold,
        pad=int(block_size) // 2,
        true_feat=int(feat),
        tile_rows=int(tb),
    )
    seed_arr = jnp.asarray([seed], dtype=jnp.int32)
    n_elems = batch * feat_p

    out2 = pl.pallas_call(
        kernel,
        out_shape=jax.ShapeDtypeStruct(x2.shape, x2.dtype),
        grid_spec=pltpu.PrefetchScalarGridSpec(
            num_scalar_prefetch=1,                        # seed -> SMEM
            grid=grid,
            in_specs=[pl.BlockSpec((tb, feat_p), lambda i, s: (i, 0))],
            out_specs=pl.BlockSpec((tb, feat_p), lambda i, s: (i, 0)),
        ),
        compiler_params=pltpu.CompilerParams(
            dimension_semantics=("parallel",),            # shard batch tiles across TCs
            vmem_limit_bytes=vmem_limit,
        ),
        cost_estimate=pl.CostEstimate(
            flops=30 * n_elems,
            transcendentals=0,
            bytes_accessed=2 * n_elems * itemsize,
        ),
    )(seed_arr, x2)

    if feat_p != feat:
        out2 = out2[:, :feat]
    return out2.reshape(orig_shape)


if __name__ == "__main__":
    key = jax.random.PRNGKey(0)
    # Fully-connected activations: (batch, hidden) — small, vreg-friendly shape.
    x = jax.random.normal(key, (8, 128), dtype=jnp.float32)

    # Training mode: run the Pallas kernel.
    y = dropblock1d(x, seed=42, block_size=3, drop_prob=0.1, training=True)
    y = jax.block_until_ready(y)

    # Sanity checks: shape/dtype preserved; every element is either kept exactly
    # (== x) or zeroed (mask_block in {0,1} => out = x or 0).
    assert y.shape == x.shape and y.dtype == x.dtype
    assert bool(jnp.all((y == x) | (y == 0.0))), "outputs must be x or 0 elementwise"
    n_dropped = int(jnp.sum(y == 0.0))
    assert 0 < n_dropped < x.size, "expected some (but not all) elements dropped"

    # Eval mode: identity pass-through.
    y_eval = dropblock1d(x, seed=42, block_size=3, drop_prob=0.1, training=False)
    assert bool(jnp.all(y_eval == x))

    print("KERNEL_OK")
</pallas_src>

<mosaic_0001>
module attributes {stable_mosaic.version = 11 : i64} {
  func.func @_dropblock1d_kernel(%arg0: i32, %arg1: memref<1xi32, #tpu.memory_space<smem>>, %arg2: memref<8x128xf32, #tpu.memory_space<vmem>>, %arg3: memref<8x128xf32, #tpu.memory_space<vmem>>) attributes {dimension_semantics = [#tpu.dimension_semantics<parallel>], iteration_bounds = array<i64: 1>, scalar_prefetch = 1 : i64, scratch_operands = 0 : i64, tpu.core_type = #tpu.core_type<tc>, window_params = [{transform_indices = @transform_0, window_bounds = array<i64: 8, 128>}, {transform_indices = @transform_1, window_bounds = array<i64: 8, 128>}]} {
    %0 = tpu.iota {dimensions = array<i32: 0>} : vector<8x128xi32>
    %1 = tpu.iota {dimensions = array<i32: 1>} : vector<8x128xi32>
    %c8_i32 = arith.constant 8 : i32
    %2 = arith.muli %arg0, %c8_i32 : i32
    %3 = vector.broadcast %2 : i32 to vector<8x128xi32>
    %4 = arith.addi %0, %3 : vector<8x128xi32>
    %c128_i32 = arith.constant 128 : i32
    %5 = vector.broadcast %c128_i32 : i32 to vector<8x128xi32>
    %6 = arith.muli %4, %5 : vector<8x128xi32>
    %7 = arith.addi %6, %1 : vector<8x128xi32>
    %c0 = arith.constant 0 : index
    %8 = memref.load %arg1[%c0] : memref<1xi32, #tpu.memory_space<smem>>
    %c-1640531527_i32 = arith.constant -1640531527 : i32
    %9 = arith.muli %8, %c-1640531527_i32 : i32
    %10 = vector.broadcast %9 : i32 to vector<8x128xi32>
    %11 = arith.addi %7, %10 : vector<8x128xi32>
    %c16_i32 = arith.constant 16 : i32
    %12 = vector.broadcast %c16_i32 : i32 to vector<8x128xi32>
    %13 = arith.shrsi %11, %12 : vector<8x128xi32>
    %c65535_i32 = arith.constant 65535 : i32
    %14 = vector.broadcast %c65535_i32 : i32 to vector<8x128xi32>
    %15 = arith.andi %13, %14 : vector<8x128xi32>
    %16 = arith.xori %11, %15 : vector<8x128xi32>
    %c2146121005_i32 = arith.constant 2146121005 : i32
    %17 = vector.broadcast %c2146121005_i32 : i32 to vector<8x128xi32>
    %18 = arith.muli %16, %17 : vector<8x128xi32>
    %c15_i32 = arith.constant 15 : i32
    %19 = vector.broadcast %c15_i32 : i32 to vector<8x128xi32>
    %20 = arith.shrsi %18, %19 : vector<8x128xi32>
    %c131071_i32 = arith.constant 131071 : i32
    %21 = vector.broadcast %c131071_i32 : i32 to vector<8x128xi32>
    %22 = arith.andi %20, %21 : vector<8x128xi32>
    %23 = arith.xori %18, %22 : vector<8x128xi32>
    %c-2073254261_i32 = arith.constant -2073254261 : i32
    %24 = vector.broadcast %c-2073254261_i32 : i32 to vector<8x128xi32>
    %25 = arith.muli %23, %24 : vector<8x128xi32>
    %c16_i32_0 = arith.constant 16 : i32
    %26 = vector.broadcast %c16_i32_0 : i32 to vector<8x128xi32>
    %27 = arith.shrsi %25, %26 : vector<8x128xi32>
    %c65535_i32_1 = arith.constant 65535 : i32
    %28 = vector.broadcast %c65535_i32_1 : i32 to vector<8x128xi32>
    %29 = arith.andi %27, %28 : vector<8x128xi32>
    %30 = arith.xori %25, %29 : vector<8x128xi32>
    %c2147483647_i32 = arith.constant 2147483647 : i32
    %31 = vector.broadcast %c2147483647_i32 : i32 to vector<8x128xi32>
    %32 = arith.andi %30, %31 : vector<8x128xi32>
    %c72719023_i32 = arith.constant 72719023 : i32
    %33 = vector.broadcast %c72719023_i32 : i32 to vector<8x128xi32>
    %34 = arith.cmpi slt, %32, %33 : vector<8x128xi32>
    %c1_i32 = arith.constant 1 : i32
    %c0_i32 = arith.constant 0 : i32
    %35 = vector.broadcast %c1_i32 : i32 to vector<8x128xi32>
    %36 = vector.broadcast %c0_i32 : i32 to vector<8x128xi32>
    %37 = arith.select %34, %35, %36 : vector<8x128xi1>, vector<8x128xi32>
    %c0_i32_2 = arith.constant 0 : i32
    %38 = vector.broadcast %c0_i32_2 : i32 to vector<8x1xi32>
    %39 = vector.extract_strided_slice %37 {offsets = [0, 1], sizes = [8, 127], strides = [1, 1]} : vector<8x128xi32> to vector<8x127xi32>
    %40 = tpu.concatenate %39, %38 in 1 : vector<8x127xi32>, vector<8x1xi32> -> vector<8x128xi32>
    %41 = arith.ori %37, %40 : vector<8x128xi32>
    %42 = vector.extract_strided_slice %37 {offsets = [0, 0], sizes = [8, 127], strides = [1, 1]} : vector<8x128xi32> to vector<8x127xi32>
    %43 = tpu.concatenate %38, %42 in 1 : vector<8x1xi32>, vector<8x127xi32> -> vector<8x128xi32>
    %44 = arith.ori %41, %43 : vector<8x128xi32>
    %c0_3 = arith.constant 0 : index
    %c0_4 = arith.constant 0 : index
    %45 = vector.load %arg2[%c0_3, %c0_4] : memref<8x128xf32, #tpu.memory_space<vmem>>, vector<8x128xf32>
    %c0_i32_5 = arith.constant 0 : i32
    %46 = vector.broadcast %c0_i32_5 : i32 to vector<8x128xi32>
    %47 = arith.cmpi sgt, %44, %46 : vector<8x128xi32>
    %cst = arith.constant 0.000000e+00 : f32
    %48 = vector.broadcast %cst : f32 to vector<8x128xf32>
    %49 = arith.select %47, %48, %45 : vector<8x128xi1>, vector<8x128xf32>
    %c0_6 = arith.constant 0 : index
    %c0_7 = arith.constant 0 : index
    %50 = vector.load %arg3[%c0_6, %c0_7] : memref<8x128xf32, #tpu.memory_space<vmem>>, vector<8x128xf32>
    tpu.vector_store %arg3[%c0_6, %c0_7], %49 {strides = array<i32>} : memref<8x128xf32, #tpu.memory_space<vmem>>, vector<8x128xf32>,
    return
  }
  func.func @transform_0(%arg0: i32, %arg1: memref<1xi32, #tpu.memory_space<smem>>) -> (i32, i32) {
    %c0_i32 = arith.constant 0 : i32
    %c0_i32_0 = arith.constant 0 : i32
    return %arg0, %c0_i32 : i32, i32
  }
  func.func @transform_1(%arg0: i32, %arg1: memref<1xi32, #tpu.memory_space<smem>>) -> (i32, i32) {
    %c0_i32 = arith.constant 0 : i32
    %c0_i32_0 = arith.constant 0 : i32
    return %arg0, %c0_i32 : i32, i32
  }
}

</mosaic_0001>

<llo_original>
// kernel: tpu_custom_call.1
$region0: #{tpu_custom_call.1}
  #allocation0 [shape = 'u32[]', space=smem, size = 0x4, offset = 0x4, fixed_abs, tag = 'smem constant byte address 0x4 - core index']
  #allocation1 [shape = 'u32[72,128]{1,0:T(1,128)}', space=vmem, size = 0x9000, scoped, tag = 'internal scratch']
  #allocation2 [shape = 's32[1]{0}', space=sflag, size = 0x4, scoped, tag = 'scoped memory for tpu_custom_call.1']
  #allocation3 [shape = 's32[1]{0:T(128)S(6)}', space=smem, size = 0x200, scoped, tag = 'prefetched SMEM operand 0']
  %s0 = inlined_call_operand.<no memory space> [shape: s32[1], index: 0, kind: input, shape index: {}]
  %s1 = inlined_call_operand.hbm [shape: f32[8,128], index: 1, kind: input, shape index: {}]
  %s2 = inlined_call_operand.hbm [shape: f32[8,128], index: 2, kind: output, shape index: {}]
  %s3 = sld [smem:[#allocation0]]
  $region18: #{tpu_custom_call.1} parent=0
    _
  %s5 = ssub.s32 1, %s3
  %s6 = scalar_select 0, %s5, %s3
  %7 = sst [smem:[#allocation3]] %s0
  $region1: #{tpu_custom_call.1} parent=0
    #allocation4 [shape = 'u8[4096]{0}', space=vmem, size = 0x1000, scoped, tag = 'input window, operand 1, single buffered']
    #allocation5 [shape = 's32[1]{0}', space=sflag, size = 0x4, scoped, tag = 'scoped memory for tpu_custom_call.1']
    #allocation6 [shape = 's32[1]{0}', space=sflag, size = 0x4, scoped, tag = 'scoped memory for tpu_custom_call.1']
    #allocation7 [shape = 'u8[4096]{0}', space=vmem, size = 0x1000, scoped, tag = 'output window, operand 0, single buffered']
    %8 = vsyncpa [#allocation5], 0
    %9 = vsyncpa [#allocation6], 0
    // Predicated region
    $region2: #{tpu_custom_call.1} parent=1 // pred_check
      _
    $region3: #{tpu_custom_call.1} parent=1 // pred_check_branch
      %11 = sbr.rel (0) target = $region5
    $region4: #{tpu_custom_call.1} parent=1 // pred_region
      %13 = vsyncadd [#allocation5], 0
      %s15 = sshll.u32 %s1, 4
      %s16 = int_to_ptr.hbm [resolvable:$true] %s15
      %s17 = sshll.u32 [#allocation4], 4
      %s18 = int_to_ptr.vmem [resolvable:$true] %s17
      %20 = dma.hbm_to_vmem [thread:$0]  %s16, 128, %s18, [#allocation5]
    $region5: #{tpu_custom_call.1} parent=1 // pred_fallthru
      _
    // Predicated region
    $region6: #{tpu_custom_call.1} parent=1 // pred_check
      _
    $region7: #{tpu_custom_call.1} parent=1 // pred_check_branch
      %22 = sbr.rel (0) target = $region9
    $region8: #{tpu_custom_call.1} parent=1 // pred_region
      %24 = dma.done [#allocation5], 128
    $region9: #{tpu_custom_call.1} parent=1 // pred_fallthru
      _
    %v25 = vlaneseq
    %v26 = vshrl.u32 %v25, 7
    %v27 = vlaneseq
    %v28 = vand.u32 %v27, 127
    %s29 = smul.u32 0, 8
    %v30 = vstv %s29
    %v31 = vadd.s32 %v26, %v30
    %v32 = vmul.u32 %v31, 128
    %v33 = vadd.s32 %v32, %v28
    %s34 = sld [smem:[#allocation3]]
    %s35 = smul.u32 %s34, 2654435769
    %v36 = vstv %s35
    %v37 = vadd.s32 %v33, %v36
    %v38 = vshra.s32 %v37, 16
    %v39 = vand.u32 %v38, 65535
    %v40 = vxor.u32 %v37, %v39
    %v41 = vmul.u32 %v40, 2146121005
    %v42 = vshra.s32 %v41, 15
    %v43 = vand.u32 %v42, 131071
    %v44 = vxor.u32 %v41, %v43
    %v45 = vmul.u32 %v44, 2221713035
    %v46 = vshra.s32 %v45, 16
    %v47 = vand.u32 %v46, 65535
    %v48 = vxor.u32 %v45, %v47
    %v49 = vand.u32 %v48, 2147483647
    %vm50 = vcmp.lt.s32.totalorder %v49, 72719023
    %v51 = vsel %vm50, 1, 0
    %52 = vrot.lane.b32.xlu0 %v51, 127
    %v53 = vpop.permute.xlu0 %52
    %vm54 = vcmask 1039360
    %v55 = vsel %vm54, %v53, 0
    %v56 = vor.u32 %v51, %v55
    %57 = vrot.lane.b32.xlu0 %v51, 1
    %v58 = vpop.permute.xlu0 %57
    %vm59 = vcmask 7168
    %v60 = vsel %vm59, 0, %v58
    %v61 = vor.u32 %v56, %v60
    %v62 = vld [vmem:[#allocation4] sm:$0xff]
    %vm63 = vcmp.gt.s32.totalorder %v61, 0
    %v64 = vsel %vm63, 0.0, %v62
    %65 = vst [vmem:[#allocation7] sm:$0xff] %v64
    // Predicated region
    $region10: #{tpu_custom_call.1} parent=1 // pred_check
      _
    $region11: #{tpu_custom_call.1} parent=1 // pred_check_branch
      %67 = sbr.rel (0) target = $region13
    $region12: #{tpu_custom_call.1} parent=1 // pred_region
      %69 = vsyncadd [#allocation6], 0
      %s71 = sshll.u32 [#allocation7], 4
      %s72 = int_to_ptr.vmem [resolvable:$true] %s71
      %s73 = sshll.u32 %s2, 4
      %s74 = int_to_ptr.hbm [resolvable:$true] %s73
      %76 = dma.vmem_to_hbm [thread:$0]  %s72, 128, %s74, [#allocation6]
    $region13: #{tpu_custom_call.1} parent=1 // pred_fallthru
      _
    // Predicated region
    $region14: #{tpu_custom_call.1} parent=1 // pred_check
      _
    $region15: #{tpu_custom_call.1} parent=1 // pred_check_branch
      %78 = sbr.rel (0) target = $region17
    $region16: #{tpu_custom_call.1} parent=1 // pred_region
      %80 = dma.done [#allocation6], 128
    $region17: #{tpu_custom_call.1} parent=1 // pred_fallthru
      _
    %81 = vsyncpa [#allocation5], 1
    %82 = vsyncpa [#allocation6], 1

</llo_original>
